<compile_context>
chip_gen: v6e
topology: v6e:2x2x1
jax: 0.10.0
libtpu: 0.0.40
codegen_flags: <defaults>
</compile_context>

<pallas_src>
import jax
import jax.numpy as jnp
from jax.experimental import pallas as pl
from jax.experimental.pallas import tpu as pltpu


def _round_up(x, m):
    return (x + m - 1) // m * m


def mean_pool_kernel(h_ref, m_ref, o_ref, sum_ref, cnt_ref):
    # h_ref : (TB, TS, H)  hidden-state tile
    # m_ref : (TB, TS, 1)  attention-mask tile (original dtype, cast here)
    # o_ref : (TB, H)      pooled output tile (resident across the seq axis)
    # sum_ref: (TB, H) f32 accumulator; cnt_ref: (TB, 1) f32 accumulator
    s = pl.program_id(1)

    @pl.when(s == 0)
    def _init():
        sum_ref[...] = jnp.zeros_like(sum_ref)
        cnt_ref[...] = jnp.zeros_like(cnt_ref)

    h = h_ref[...].astype(jnp.float32)          # (TB, TS, H)
    m = m_ref[...].astype(jnp.float32)          # (TB, TS, 1), broadcasts over H
    sum_ref[...] += jnp.sum(h * m, axis=1)      # (TB, H)
    cnt_ref[...] += jnp.sum(m, axis=1)          # (TB, 1)

    @pl.when(s == pl.num_programs(1) - 1)
    def _finalize():
        # torch.clamp(sum_mask, min=1e-9); divide via EUP reciprocal (free slot).
        inv = pl.reciprocal(jnp.maximum(cnt_ref[...], 1e-9), approx=True)
        o_ref[...] = (sum_ref[...] * inv).astype(o_ref.dtype)


def mean_pooling(last_hidden_state, attention_mask, *, tb_target=8, ts_target=512):
    """Masked mean pooling.

    last_hidden_state: [B, S, H] float array.
    attention_mask:    [B, S] numeric/bool array (1 = valid token).
    Returns [B, H] float32 (matches the PyTorch module's semantics).
    """
    B, S, H = last_hidden_state.shape
    itemsize = jnp.dtype(last_hidden_state.dtype).itemsize

    # ---- tile selection ---------------------------------------------------
    # Keep one hidden-state input block <= ~12 MiB so the double-buffered
    # pipeline (+ mask buffers + accumulators) stays well inside v7x's 64 MiB
    # physical VMEM; v5e/v6e (128 MiB) use the same tiles with a raised
    # scoped-VMEM limit below.
    max_block_bytes = 12 * 1024 * 1024
    tb = max(8, (tb_target // 8) * 8)          # sublane-aligned batch tile
    ts = max(128, (ts_target // 128) * 128)    # lane/sublane-aligned seq tile
    while tb * ts * H * itemsize > max_block_bytes and ts > 128:
        ts //= 2

    if B <= tb:
        TB, Bp = B, B                          # full batch dim -> no pad needed
    else:
        TB, Bp = tb, _round_up(B, tb)
    if S <= ts:
        TS, Sp = S, S                          # full seq dim -> no pad needed
    else:
        TS, Sp = ts, _round_up(S, ts)

    # ---- pad to tile multiples (zero tokens/rows contribute nothing) -------
    if (Bp, Sp) != (B, S):
        last_hidden_state = jnp.pad(
            last_hidden_state, ((0, Bp - B), (0, Sp - S), (0, 0)))
        attention_mask = jnp.pad(attention_mask, ((0, Bp - B), (0, Sp - S)))

    # Mask enters as [B, S, 1] in its original narrow dtype (reshape is free);
    # the f32 cast happens on the VPU inside the kernel.
    mask3 = attention_mask.reshape(Bp, Sp, 1)

    grid = (Bp // TB, Sp // TS)

    out = pl.pallas_call(
        mean_pool_kernel,
        out_shape=jax.ShapeDtypeStruct((Bp, H), jnp.float32),
        grid_spec=pltpu.PrefetchScalarGridSpec(
            num_scalar_prefetch=0,
            grid=grid,
            in_specs=[
                pl.BlockSpec((TB, TS, H), lambda b, s: (b, s, 0)),
                pl.BlockSpec((TB, TS, 1), lambda b, s: (b, s, 0)),
            ],
            out_specs=pl.BlockSpec((TB, H), lambda b, s: (b, 0)),
            scratch_shapes=[
                pltpu.VMEM((TB, H), jnp.float32),   # running masked sum
                pltpu.VMEM((TB, 1), jnp.float32),   # running mask count
            ],
        ),
        compiler_params=pltpu.CompilerParams(
            dimension_semantics=("parallel", "arbitrary"),
            vmem_limit_bytes=64 * 1024 * 1024,
        ),
    )(last_hidden_state, mask3)

    return out[:B] if Bp != B else out


def mean_pooling_ref(last_hidden_state, attention_mask):
    """Pure-JAX reference mirroring the PyTorch forward."""
    m = attention_mask[..., None].astype(jnp.float32)
    sum_emb = jnp.sum(last_hidden_state.astype(jnp.float32) * m, axis=1)
    sum_mask = jnp.maximum(jnp.sum(m, axis=1), 1e-9)   # torch.clamp(min=1e-9)
    return sum_emb / sum_mask


if __name__ == "__main__":
    key = jax.random.PRNGKey(0)
    k1, k2 = jax.random.split(key)

    B, S, H = 2, 8, 32
    last_hidden_state = jax.random.normal(k1, (B, S, H), dtype=jnp.float32)
    # attention mask: 1s for valid tokens, 0s for padding (deterministic)
    attention_mask = (jax.random.uniform(k2, (B, S)) > 0.3).astype(jnp.int32)

    out = mean_pooling(last_hidden_state, attention_mask)
    out = jax.block_until_ready(out)

    ref = mean_pooling_ref(last_hidden_state, attention_mask)
    assert out.shape == (B, H)
    # approx EUP reciprocal in the finalize step -> slightly looser tolerance
    assert jnp.allclose(out, ref, atol=2e-3, rtol=2e-3), "mismatch vs reference"

    print("KERNEL_OK")
</pallas_src>

<mosaic_0001>
module attributes {stable_mosaic.version = 11 : i64} {
  func.func @mean_pool_kernel(%arg0: i32, %arg1: i32, %arg2: memref<2x8x32xf32, #tpu.memory_space<vmem>>, %arg3: memref<2x8x1xi32, #tpu.memory_space<vmem>>, %arg4: memref<2x32xf32, #tpu.memory_space<vmem>>, %arg5: memref<2x32xf32, #tpu.memory_space<vmem>>, %arg6: memref<2x1xf32, #tpu.memory_space<vmem>>) attributes {dimension_semantics = [#tpu.dimension_semantics<parallel>, #tpu.dimension_semantics<arbitrary>], iteration_bounds = array<i64: 1, 1>, scalar_prefetch = 0 : i64, scratch_operands = 2 : i64, tpu.core_type = #tpu.core_type<tc>, window_params = [{transform_indices = @transform_0, window_bounds = array<i64: 2, 8, 32>}, {transform_indices = @transform_1, window_bounds = array<i64: 2, 8, 1>}, {transform_indices = @transform_2, window_bounds = array<i64: 2, 32>}]} {
    %c0_i32 = arith.constant 0 : i32
    %0 = arith.cmpi eq, %arg1, %c0_i32 : i32
    %1 = arith.extui %0 : i1 to i32
    %c0_i32_0 = arith.constant 0 : i32
    %2 = arith.cmpi ne, %1, %c0_i32_0 : i32
    scf.if %2 {
      %cst_17 = arith.constant 0.000000e+00 : f32
      %19 = vector.broadcast %cst_17 : f32 to vector<2x32xf32>
      %c0_18 = arith.constant 0 : index
      %c0_19 = arith.constant 0 : index
      %20 = vector.load %arg5[%c0_18, %c0_19] : memref<2x32xf32, #tpu.memory_space<vmem>>, vector<2x32xf32>
      tpu.vector_store %arg5[%c0_18, %c0_19], %19 {strides = array<i32>} : memref<2x32xf32, #tpu.memory_space<vmem>>, vector<2x32xf32>,
      %cst_20 = arith.constant 0.000000e+00 : f32
      %21 = vector.broadcast %cst_20 : f32 to vector<2x1xf32>
      %c0_21 = arith.constant 0 : index
      %c0_22 = arith.constant 0 : index
      %22 = vector.load %arg6[%c0_21, %c0_22] : memref<2x1xf32, #tpu.memory_space<vmem>>, vector<2x1xf32>
      tpu.vector_store %arg6[%c0_21, %c0_22], %21 {strides = array<i32>} : memref<2x1xf32, #tpu.memory_space<vmem>>, vector<2x1xf32>,
    } else {
    }
    %c0 = arith.constant 0 : index
    %c0_1 = arith.constant 0 : index
    %c0_2 = arith.constant 0 : index
    %3 = vector.load %arg2[%c0, %c0_1, %c0_2] : memref<2x8x32xf32, #tpu.memory_space<vmem>>, vector<2x8x32xf32>
    %c0_3 = arith.constant 0 : index
    %c0_4 = arith.constant 0 : index
    %c0_5 = arith.constant 0 : index
    %4 = vector.load %arg3[%c0_3, %c0_4, %c0_5] : memref<2x8x1xi32, #tpu.memory_space<vmem>>, vector<2x8x1xi32>
    %5 = arith.sitofp %4 : vector<2x8x1xi32> to vector<2x8x1xf32>
    %c0_6 = arith.constant 0 : index
    %c0_7 = arith.constant 0 : index
    %6 = vector.load %arg5[%c0_6, %c0_7] : memref<2x32xf32, #tpu.memory_space<vmem>>, vector<2x32xf32>
    %7 = vector.broadcast %5 : vector<2x8x1xf32> to vector<2x8x32xf32>
    %8 = arith.mulf %3, %7 : vector<2x8x32xf32>
    %cst = arith.constant dense<0.000000e+00> : vector<2x32xf32>
    %9 = vector.multi_reduction <add>, %8, %cst [1] : vector<2x8x32xf32> to vector<2x32xf32>
    %10 = arith.addf %6, %9 : vector<2x32xf32>
    %c0_8 = arith.constant 0 : index
    %c0_9 = arith.constant 0 : index
    %11 = vector.load %arg5[%c0_8, %c0_9] : memref<2x32xf32, #tpu.memory_space<vmem>>, vector<2x32xf32>
    tpu.vector_store %arg5[%c0_8, %c0_9], %10 {strides = array<i32>} : memref<2x32xf32, #tpu.memory_space<vmem>>, vector<2x32xf32>,
    %c0_10 = arith.constant 0 : index
    %c0_11 = arith.constant 0 : index
    %12 = vector.load %arg6[%c0_10, %c0_11] : memref<2x1xf32, #tpu.memory_space<vmem>>, vector<2x1xf32>
    %cst_12 = arith.constant dense<0.000000e+00> : vector<2x1xf32>
    %13 = vector.multi_reduction <add>, %5, %cst_12 [1] : vector<2x8x1xf32> to vector<2x1xf32>
    %14 = arith.addf %12, %13 : vector<2x1xf32>
    %c0_13 = arith.constant 0 : index
    %c0_14 = arith.constant 0 : index
    %15 = vector.load %arg6[%c0_13, %c0_14] : memref<2x1xf32, #tpu.memory_space<vmem>>, vector<2x1xf32>
    tpu.vector_store %arg6[%c0_13, %c0_14], %14 {strides = array<i32>} : memref<2x1xf32, #tpu.memory_space<vmem>>, vector<2x1xf32>,
    %c0_i32_15 = arith.constant 0 : i32
    %16 = arith.cmpi eq, %arg1, %c0_i32_15 : i32
    %17 = arith.extui %16 : i1 to i32
    %c0_i32_16 = arith.constant 0 : i32
    %18 = arith.cmpi ne, %17, %c0_i32_16 : i32
    scf.if %18 {
      %c0_17 = arith.constant 0 : index
      %c0_18 = arith.constant 0 : index
      %19 = vector.load %arg6[%c0_17, %c0_18] : memref<2x1xf32, #tpu.memory_space<vmem>>, vector<2x1xf32>
      %cst_19 = arith.constant 9.99999971E-10 : f32
      %20 = vector.broadcast %cst_19 : f32 to vector<2x1xf32>
      %21 = arith.maximumf %19, %20 : vector<2x1xf32>
      %22 = tpu.reciprocal %21 {approx = true} : vector<2x1xf32> -> vector<2x1xf32>
      %c0_20 = arith.constant 0 : index
      %c0_21 = arith.constant 0 : index
      %23 = vector.load %arg5[%c0_20, %c0_21] : memref<2x32xf32, #tpu.memory_space<vmem>>, vector<2x32xf32>
      %24 = vector.broadcast %22 : vector<2x1xf32> to vector<2x32xf32>
      %25 = arith.mulf %23, %24 : vector<2x32xf32>
      %c0_22 = arith.constant 0 : index
      %c0_23 = arith.constant 0 : index
      %26 = vector.load %arg4[%c0_22, %c0_23] : memref<2x32xf32, #tpu.memory_space<vmem>>, vector<2x32xf32>
      tpu.vector_store %arg4[%c0_22, %c0_23], %25 {strides = array<i32>} : memref<2x32xf32, #tpu.memory_space<vmem>>, vector<2x32xf32>,
    } else {
    }
    return
  }
  func.func @transform_0(%arg0: i32, %arg1: i32) -> (i32, i32, i32) {
    %c0_i32 = arith.constant 0 : i32
    %c0_i32_0 = arith.constant 0 : i32
    return %arg0, %arg1, %c0_i32 : i32, i32, i32
  }
  func.func @transform_1(%arg0: i32, %arg1: i32) -> (i32, i32, i32) {
    %c0_i32 = arith.constant 0 : i32
    %c0_i32_0 = arith.constant 0 : i32
    return %arg0, %arg1, %c0_i32 : i32, i32, i32
  }
  func.func @transform_2(%arg0: i32, %arg1: i32) -> (i32, i32) {
    %c0_i32 = arith.constant 0 : i32
    %c0_i32_0 = arith.constant 0 : i32
    return %arg0, %c0_i32 : i32, i32
  }
}

</mosaic_0001>

<llo_original>
// kernel: tpu_custom_call.1
$region0: #{tpu_custom_call.1}
  #allocation0 [shape = 'u32[]', space=smem, size = 0x4, offset = 0x4, fixed_abs, tag = 'smem constant byte address 0x4 - core index']
  #allocation1 [shape = 'u32[144,128]{1,0:T(1,128)}', space=vmem, size = 0x12000, scoped, tag = 'internal scratch']
  #allocation2 [shape = 'f32[2,32]{1,0:T(2,128)}', space=vmem, size = 0x400, scoped, tag = 'scratch operand']
  #allocation3 [shape = 'f32[2,1]{1,0:T(2,128)}', space=vmem, size = 0x400, scoped, tag = 'scratch operand']
  %s0 = inlined_call_operand.vmem [shape: f32[2,8,32], index: 0, kind: input, shape index: {}]
  %s1 = inlined_call_operand.vmem [shape: s32[2,8,1], index: 1, kind: input, shape index: {}]
  %s2 = inlined_call_operand.hbm [shape: f32[2,32], index: 2, kind: output, shape index: {}]
  %s3 = sld [smem:[#allocation0]]
  $region26: #{tpu_custom_call.1} parent=0
    _
  %s5 = ssub.s32 1, %s3
  %s6 = scalar_select 0, %s5, %s3
  $region1: #{tpu_custom_call.1} parent=0
    #allocation4 [shape = 'u8[1024]{0}', space=vmem, size = 0x400, scoped, tag = 'output window, operand 0, single buffered']
    #allocation5 [shape = 's32[1]{0}', space=sflag, size = 0x4, scoped, tag = 'scoped memory for tpu_custom_call.1']
    %7 = vsyncpa [#allocation5], 0
    // Predicated region
    $region2: #{tpu_custom_call.1} parent=1 // pred_check
      _
    $region3: #{tpu_custom_call.1} parent=1 // pred_check_branch
      %9 = sbr.rel (0) target = $region5
    $region4: #{tpu_custom_call.1} parent=1 // pred_region
      _
    $region5: #{tpu_custom_call.1} parent=1 // pred_fallthru
      _
    // Predicated region
    $region6: #{tpu_custom_call.1} parent=1 // pred_check
      _
    $region7: #{tpu_custom_call.1} parent=1 // pred_check_branch
      %11 = sbr.rel (0) target = $region9
    $region8: #{tpu_custom_call.1} parent=1 // pred_region
      _
    $region9: #{tpu_custom_call.1} parent=1 // pred_fallthru
      _
    %p12 = scmp.eq.s32.totalorder 0, 0
    // Predicated region
    $region10: #{tpu_custom_call.1} parent=1 // pred_check
      %p13 = pneg %p12
    $region11: #{tpu_custom_call.1} parent=1 // pred_check_branch
      %15 = sbr.rel (%p13) target = $region13
    $region12: #{tpu_custom_call.1} parent=1 // pred_region
      %vm16 = vcmask 254976
      %17 = vst.msk [vmem:[#allocation2] sm:$0x3] %vm16, 0.0
      %vm18 = vcmask 1024
      %19 = vst.msk [vmem:[#allocation3] sm:$0x3] %vm18, 0.0
    $region13: #{tpu_custom_call.1} parent=1 // pred_fallthru
      _
    %v20 = vld [vmem:[%s0] sm:$0xff]
    %v21 = vld [vmem:[%s0 + $0x8] sm:$0xff]
    %v22 = vld [vmem:[%s1] sm:$0xff]
    %v23 = vld [vmem:[%s1 + $0x8] sm:$0xff]
    %v24 = vcvt.s32.f32 %v22
    %v25 = vcvt.s32.f32 %v23
    %v26 = vld [vmem:[#allocation2] sm:$0x3]
    %28 = vset.pattern.permute.xlu0 0
    %29 = vperm.xlu0 %28, %v24
    %v30 = vpop.permute.xlu0 %29
    %33 = vset.pattern.permute.xlu0 0
    %34 = vperm.xlu0 %33, %v25
    %v35 = vpop.permute.xlu0 %34
    %v37 = vmul.f32 %v20, %v30
    %v38 = vmul.f32 %v21, %v35
    %vm39 = vcmask 261120
    %v40 = vsel %vm39, %v37, 0.0
    %v41 = vrot.slane %v40, 4
    %v42 = vadd.f32 %v40, %v41
    %v43 = vrot.slane %v42, 2
    %v44 = vadd.f32 %v42, %v43
    %v45 = vrot.slane %v44, 1
    %v46 = vadd.f32 %v44, %v45
    %v47 = vsel %vm39, %v38, 0.0
    %v48 = vrot.slane %v47, 4
    %v49 = vadd.f32 %v47, %v48
    %v50 = vrot.slane %v49, 2
    %v51 = vadd.f32 %v49, %v50
    %v52 = vrot.slane %v51, 1
    %v53 = vadd.f32 %v51, %v52
    %vm56 = vcmask 1041409
    %v57 = vsel %vm56, %v53, %v46
    %v59 = vadd.f32 %v26, %v57
    %vm60 = vcmask 254976
    %61 = vst.msk [vmem:[#allocation2] sm:$0x3] %vm60, %v59
    %v62 = vld [vmem:[#allocation3] sm:$0x3]
    %vm63 = vcmask 7168
    %v64 = vsel %vm63, %v24, 0.0
    %v65 = vrot.slane %v64, 4
    %v66 = vadd.f32 %v64, %v65
    %v67 = vrot.slane %v66, 2
    %v68 = vadd.f32 %v66, %v67
    %v69 = vrot.slane %v68, 1
    %v70 = vadd.f32 %v68, %v69
    %v71 = vsel %vm63, %v25, 0.0
    %v72 = vrot.slane %v71, 4
    %v73 = vadd.f32 %v71, %v72
    %v74 = vrot.slane %v73, 2
    %v75 = vadd.f32 %v73, %v74
    %v76 = vrot.slane %v75, 1
    %v77 = vadd.f32 %v75, %v76
    %v80 = vsel %vm56, %v77, %v70
    %v82 = vadd.f32 %v62, %v80
    %vm83 = vcmask 1024
    %84 = vst.msk [vmem:[#allocation3] sm:$0x3] %vm83, %v82
    // Predicated region
    $region14: #{tpu_custom_call.1} parent=1 // pred_check
      %p85 = pneg %p12
    $region15: #{tpu_custom_call.1} parent=1 // pred_check_branch
      %87 = sbr.rel (%p85) target = $region17
    $region16: #{tpu_custom_call.1} parent=1 // pred_region
      %v88 = vld [vmem:[#allocation3] sm:$0x3]
      %v89 = vmax.f32 %v88, 1e-09
      %v90 = vrcp.pop %v89
      %v91 = vld [vmem:[#allocation2] sm:$0x3]
      %93 = vset.pattern.permute.xlu0 0
      %94 = vperm.xlu0 %93, %v90
      %v95 = vpop.permute.xlu0 %94
      %v97 = vmul.f32 %v91, %v95
      %98 = vst.msk [vmem:[#allocation4] sm:$0x3] %vm60, %v97
    $region17: #{tpu_custom_call.1} parent=1 // pred_fallthru
      _
    // Predicated region
    $region18: #{tpu_custom_call.1} parent=1 // pred_check
      _
    $region19: #{tpu_custom_call.1} parent=1 // pred_check_branch
      %100 = sbr.rel (0) target = $region21
    $region20: #{tpu_custom_call.1} parent=1 // pred_region
      %s102 = ssub.s32 32, 32
      %103 = vsyncadd [#allocation5], %s102
      %s105 = sshll.u32 [#allocation4], 4
      %s106 = int_to_ptr.vmem [resolvable:$true] %s105
      %108 = dma.vmem_to_hbm [thread:$0]  %s106, 32, %s2, [#allocation5]
    $region21: #{tpu_custom_call.1} parent=1 // pred_fallthru
      _
    // Predicated region
    $region22: #{tpu_custom_call.1} parent=1 // pred_check
      _
    $region23: #{tpu_custom_call.1} parent=1 // pred_check_branch
      %110 = sbr.rel (0) target = $region25
    $region24: #{tpu_custom_call.1} parent=1 // pred_region
      %111 = dma.done [#allocation5], 32
    $region25: #{tpu_custom_call.1} parent=1 // pred_fallthru
      _
    %112 = vsyncpa [#allocation5], 1

</llo_original>
